<compile_context>
chip_gen: v6e
topology: v6e:2x2x1
jax: 0.10.0
libtpu: 0.0.40
codegen_flags: <defaults>
</compile_context>

<pallas_src>
import jax
import jax.numpy as jnp
import numpy as np
from jax.experimental import pallas as pl
from jax.experimental.pallas import tpu as pltpu


def _round_up(x, m):
    return ((x + m - 1) // m) * m


def _cdiv(a, b):
    return -(-a // b)


def _num_tensorcores():
    """Best-effort TensorCores-per-chip (2 on megacore generations, else 1)."""
    try:
        info = pltpu.get_tpu_info()
        for attr in ("num_cores", "core_count", "num_tensorcores",
                     "tensorcores_per_chip"):
            v = getattr(info, attr, None)
            if isinstance(v, int) and 1 <= v <= 8:
                return v
    except Exception:
        pass
    try:
        kind = jax.devices()[0].device_kind.lower()
        if any(t in kind for t in ("v7", "v5p", "v4")):
            return 2
    except Exception:
        pass
    return 1


def _make_kernel(num_classes, s_blk, n_valid, n_blocks, n_inner):
    """Kernel closure over the static tiling parameters."""

    def kernel(loc_ref, loct_ref, cls_ref, tgt_ref, out_ref):
        # loc_ref / loct_ref : (2, s_blk, 128)  box coords
        # cls_ref            : (C, s_blk, 128)  logits
        # tgt_ref            : (1, s_blk, 128)  int32 class targets
        # out_ref            : (8, 128)         resident f32 accumulator; rows:
        #                      0=n_pos 1=n_neg 2=smoothL1 3=ce_pos 4=ce_neg
        inner = pl.program_id(1)

        @pl.when(inner == 0)
        def _init():
            out_ref[...] = jnp.zeros_like(out_ref)

        # Global anchor index of every element of this tile; used to mask the
        # ragged tail (B*A not a multiple of 128), the partial boundary block
        # (S not a multiple of s_blk) and the clamped duplicate block that can
        # appear when the block count is not divisible by the core count.
        blk = pl.program_id(0) * n_inner + inner          # un-clamped linear block id
        base = blk * (s_blk * 128)
        row = jax.lax.broadcasted_iota(jnp.int32, (s_blk, 128), 0)
        lane = jax.lax.broadcasted_iota(jnp.int32, (s_blk, 128), 1)
        anchor = base + row * 128 + lane
        valid = anchor < n_valid

        tgt = tgt_ref[0]                                  # (s_blk, 128) int32
        pos = jnp.logical_and(valid, tgt > 0)
        neg = jnp.logical_and(valid, tgt == 0)

        # --- Localization loss: smooth L1 (beta=1), unrolled over the 2 coords ---
        loc_sum = jnp.zeros((s_blk, 128), jnp.float32)
        for k in range(2):
            d = loc_ref[k].astype(jnp.float32) - loct_ref[k].astype(jnp.float32)
            ad = jnp.abs(d)
            loc_sum = loc_sum + jnp.where(ad < 1.0, 0.5 * d * d, ad - 0.5)
        loc_sum = jnp.where(pos, loc_sum, 0.0)            # select (NaN-safe), not multiply

        # --- Classification loss: C-unrolled pure-VPU/EUP logsumexp + target gather ---
        logits = [cls_ref[c].astype(jnp.float32) for c in range(num_classes)]
        m = logits[0]
        for c in range(1, num_classes):
            m = jnp.maximum(m, logits[c])
        se = jnp.zeros_like(m)
        tgt_logit = jnp.zeros_like(m)
        for c in range(num_classes):
            se = se + jnp.exp(logits[c] - m)
            tgt_logit = tgt_logit + jnp.where(tgt == c, logits[c], 0.0)
        nll = jnp.log(se) + m - tgt_logit                 # (s_blk, 128)

        # --- Sublane (XLU) reduction to lane partials, accumulate in resident block ---
        out_ref[0:1, :] += jnp.sum(pos.astype(jnp.float32), axis=0, keepdims=True)
        out_ref[1:2, :] += jnp.sum(neg.astype(jnp.float32), axis=0, keepdims=True)
        out_ref[2:3, :] += jnp.sum(loc_sum, axis=0, keepdims=True)
        out_ref[3:4, :] += jnp.sum(jnp.where(pos, nll, 0.0), axis=0, keepdims=True)
        out_ref[4:5, :] += jnp.sum(jnp.where(neg, nll, 0.0), axis=0, keepdims=True)

    return kernel


def _reference_loss(loc, cls, loc_t, cls_t):
    """Plain-JAX reference implementing the same math (also the tiny-N fallback)."""
    cls_t = cls_t.astype(jnp.int32)
    pos = cls_t > 0
    neg = cls_t == 0
    n_pos = pos.sum().astype(jnp.float32)
    n_neg = neg.sum().astype(jnp.float32)
    d = loc.astype(jnp.float32) - loc_t.astype(jnp.float32)
    ad = jnp.abs(d)
    sl1 = jnp.where(ad < 1.0, 0.5 * d * d, ad - 0.5)
    loss_loc = (sl1 * pos[..., None]).sum()
    logp = jax.nn.log_softmax(cls.astype(jnp.float32), axis=-1)
    nll = -jnp.take_along_axis(logp, cls_t[..., None], axis=-1)[..., 0]
    ce_pos = (nll * pos).sum()
    ce_neg = (nll * neg).sum()
    # Mirror the PyTorch control flow: with zero positives/negatives the
    # un-normalized CE term is 0 and the division yields NaN (0 / 0), exactly
    # as the reference module (0 / tensor(0.) == nan).
    ce_pos = jnp.where(n_pos > 0, ce_pos, 0.0)
    ce_neg = jnp.where(n_neg > 0, ce_neg, 0.0)
    return ce_pos / n_pos, ce_neg / n_neg, loss_loc / n_pos


def dosed_simple_loss(localizations, classifications,
                      localizations_target, classifications_target,
                      *, block_anchors=None, min_anchors_for_pallas=2048):
    """Returns (loss_cls_pos_norm, loss_cls_neg_norm, loss_loc_norm)."""
    B, A, _ = localizations.shape
    C = classifications.shape[-1]
    N = B * A

    # Tiny problems are dominated by launch + relayout overhead -> plain JAX.
    if N < min_anchors_for_pallas:
        return _reference_loss(localizations, classifications,
                               localizations_target, classifications_target)

    N128 = _round_up(N, 128)
    S = N128 // 128                                   # number of 128-anchor rows

    # Block sizing: big blocks to amortize per-step cost, capped so the
    # double-buffered working set stays well inside v7x's 64 MiB VMEM
    # (<= ~2 x 8 MiB inputs + 4 KiB output, under the 32 MiB scoped limit).
    row_bytes = 128 * (4 * localizations.dtype.itemsize
                       + C * classifications.dtype.itemsize
                       + 4)                           # int32 targets
    budget = 8 * 1024 * 1024
    s_auto = max(8, min(2048, budget // row_bytes))
    if block_anchors is not None:
        s_auto = min(s_auto, max(8, block_anchors // 128))
    s_auto = max(8, (s_auto // 8) * 8)                # sublane multiple

    s_blk = S if S <= s_auto else s_auto              # full extent is always legal
    n_blocks = _cdiv(S, s_blk)

    num_tc = _num_tensorcores()
    n_outer = num_tc if (num_tc > 1 and n_blocks >= 2 * num_tc) else 1
    n_inner = _cdiv(n_blocks, n_outer)

    # Single relayout pass per tensor: transpose component axis to front and pad
    # the anchor axis by at most 127 elements so it reshapes to (K, S, 128).
    def relayout(x, k):
        y = jnp.transpose(x, (2, 0, 1)).reshape(k, N)
        if N128 != N:
            y = jnp.pad(y, ((0, 0), (0, N128 - N)))
        return y.reshape(k, S, 128)

    loc3 = relayout(localizations, 2)
    loct3 = relayout(localizations_target, 2)
    cls3 = relayout(classifications, C)
    tgt2 = classifications_target.astype(jnp.int32).reshape(1, N)
    if N128 != N:
        tgt2 = jnp.pad(tgt2, ((0, 0), (0, N128 - N)), constant_values=-1)
    tgt3 = tgt2.reshape(1, S, 128)

    def idx_map(o, i):
        # Clamp so the DMA window always lies inside the array; the kernel's
        # validity mask (built from the UN-clamped block id) zeroes any
        # duplicated / out-of-range work.
        return (0, jnp.minimum(o * n_inner + i, n_blocks - 1), 0)

    kernel = _make_kernel(C, s_blk, N, n_blocks, n_inner)

    partials = pl.pallas_call(
        kernel,
        out_shape=jax.ShapeDtypeStruct((n_outer * 8, 128), jnp.float32),
        grid_spec=pltpu.PrefetchScalarGridSpec(
            num_scalar_prefetch=0,
            grid=(n_outer, n_inner),
            in_specs=[
                pl.BlockSpec((2, s_blk, 128), idx_map),
                pl.BlockSpec((2, s_blk, 128), idx_map),
                pl.BlockSpec((C, s_blk, 128), idx_map),
                pl.BlockSpec((1, s_blk, 128), idx_map),
            ],
            out_specs=pl.BlockSpec((8, 128), lambda o, i: (o, 0)),
        ),
        compiler_params=pltpu.CompilerParams(
            dimension_semantics=("parallel", "arbitrary"),
            vmem_limit_bytes=32 * 1024 * 1024),
    )(loc3, loct3, cls3, tgt3)

    # Final tiny reduction + normalization in plain JAX.
    sums = partials.reshape(n_outer, 8, 128).sum(axis=(0, 2))
    n_pos, n_neg = sums[0], sums[1]
    loss_loc, ce_pos, ce_neg = sums[2], sums[3], sums[4]

    # Mirror the PyTorch module: zero CE when no positives/negatives, then the
    # division by 0 produces NaN exactly like the reference (0 / tensor(0.)).
    ce_pos = jnp.where(n_pos > 0, ce_pos, 0.0)
    ce_neg = jnp.where(n_neg > 0, ce_neg, 0.0)

    return ce_pos / n_pos, ce_neg / n_neg, loss_loc / n_pos


if __name__ == "__main__":
    # batch=3, default events (anchors)=1400, number_of_classes=5
    # -> N = 4200 anchors: not a multiple of 128, so the ragged-tail masking,
    # partial-boundary-block and multi-step accumulation paths are exercised.
    B, A, C = 3, 1400, 5

    key = jax.random.PRNGKey(0)
    k1, k2, k3, k4 = jax.random.split(key, 4)

    localizations = jax.random.normal(k1, (B, A, 2), dtype=jnp.float32)
    localizations_target = jax.random.normal(k2, (B, A, 2), dtype=jnp.float32)
    classifications = jax.random.normal(k3, (B, A, C), dtype=jnp.float32)
    classifications_target = jax.random.randint(k4, (B, A), 0, C, dtype=jnp.int32)

    # Small block -> multi-step grid on this small problem (production default
    # uses ~8 MiB / up to 256K-anchor blocks).
    out = dosed_simple_loss(localizations, classifications,
                            localizations_target, classifications_target,
                            block_anchors=1024)
    out = jax.block_until_ready(out)

    ref = _reference_loss(localizations, classifications,
                          localizations_target, classifications_target)
    for got, want in zip(out, ref):
        np.testing.assert_allclose(np.asarray(got), np.asarray(want),
                                   rtol=1e-4, atol=1e-4)

    # Tiny-problem fallback path (bypasses Pallas; launch-overhead dominated).
    small = dosed_simple_loss(localizations[:, :64], classifications[:, :64],
                              localizations_target[:, :64],
                              classifications_target[:, :64])
    jax.block_until_ready(small)

    print("KERNEL_OK")
</pallas_src>

<mosaic_0001>
module attributes {stable_mosaic.version = 11 : i64} {
  func.func @kernel(%arg0: i32, %arg1: i32, %arg2: memref<2x8x128xf32, #tpu.memory_space<vmem>>, %arg3: memref<2x8x128xf32, #tpu.memory_space<vmem>>, %arg4: memref<5x8x128xf32, #tpu.memory_space<vmem>>, %arg5: memref<1x8x128xi32, #tpu.memory_space<vmem>>, %arg6: memref<8x128xf32, #tpu.memory_space<vmem>>) attributes {dimension_semantics = [#tpu.dimension_semantics<parallel>, #tpu.dimension_semantics<arbitrary>], iteration_bounds = array<i64: 1, 5>, scalar_prefetch = 0 : i64, scratch_operands = 0 : i64, tpu.core_type = #tpu.core_type<tc>, window_params = [{transform_indices = @transform_0, window_bounds = array<i64: 2, 8, 128>}, {transform_indices = @transform_1, window_bounds = array<i64: 2, 8, 128>}, {transform_indices = @transform_2, window_bounds = array<i64: 5, 8, 128>}, {transform_indices = @transform_3, window_bounds = array<i64: 1, 8, 128>}, {transform_indices = @transform_4, window_bounds = array<i64: 8, 128>}]} {
    %c0_i32 = arith.constant 0 : i32
    %0 = arith.cmpi eq, %arg1, %c0_i32 : i32
    %1 = arith.extui %0 : i1 to i32
    %c0_i32_0 = arith.constant 0 : i32
    %2 = arith.cmpi ne, %1, %c0_i32_0 : i32
    scf.if %2 {
      %cst_70 = arith.constant 0.000000e+00 : f32
      %148 = vector.broadcast %cst_70 : f32 to vector<8x128xf32>
      %c0_71 = arith.constant 0 : index
      %c0_72 = arith.constant 0 : index
      %149 = vector.load %arg6[%c0_71, %c0_72] : memref<8x128xf32, #tpu.memory_space<vmem>>, vector<8x128xf32>
      tpu.vector_store %arg6[%c0_71, %c0_72], %148 {strides = array<i32>} : memref<8x128xf32, #tpu.memory_space<vmem>>, vector<8x128xf32>,
    } else {
    }
    %c5_i32 = arith.constant 5 : i32
    %3 = arith.muli %arg0, %c5_i32 : i32
    %4 = arith.addi %3, %arg1 : i32
    %c1024_i32 = arith.constant 1024 : i32
    %5 = arith.muli %4, %c1024_i32 : i32
    %6 = tpu.iota {dimensions = array<i32: 0>} : vector<8x128xi32>
    %7 = tpu.iota {dimensions = array<i32: 1>} : vector<8x128xi32>
    %c128_i32 = arith.constant 128 : i32
    %8 = vector.broadcast %c128_i32 : i32 to vector<8x128xi32>
    %9 = arith.muli %6, %8 : vector<8x128xi32>
    %10 = vector.broadcast %5 : i32 to vector<8x128xi32>
    %11 = arith.addi %10, %9 : vector<8x128xi32>
    %12 = arith.addi %11, %7 : vector<8x128xi32>
    %c4200_i32 = arith.constant 4200 : i32
    %13 = vector.broadcast %c4200_i32 : i32 to vector<8x128xi32>
    %14 = arith.cmpi slt, %12, %13 : vector<8x128xi32>
    %c0 = arith.constant 0 : index
    %c0_1 = arith.constant 0 : index
    %c0_2 = arith.constant 0 : index
    %15 = vector.load %arg5[%c0, %c0_1, %c0_2] : memref<1x8x128xi32, #tpu.memory_space<vmem>>, vector<1x8x128xi32>
    %16 = vector.shape_cast %15 : vector<1x8x128xi32> to vector<8x128xi32>
    %c0_i32_3 = arith.constant 0 : i32
    %17 = vector.broadcast %c0_i32_3 : i32 to vector<8x128xi32>
    %18 = arith.cmpi sgt, %16, %17 : vector<8x128xi32>
    %19 = arith.andi %14, %18 : vector<8x128xi1>
    %c0_i32_4 = arith.constant 0 : i32
    %20 = vector.broadcast %c0_i32_4 : i32 to vector<8x128xi32>
    %21 = arith.cmpi eq, %16, %20 : vector<8x128xi32>
    %22 = arith.andi %14, %21 : vector<8x128xi1>
    %cst = arith.constant 0.000000e+00 : f32
    %23 = vector.broadcast %cst : f32 to vector<8x128xf32>
    %c0_5 = arith.constant 0 : index
    %c0_6 = arith.constant 0 : index
    %c0_7 = arith.constant 0 : index
    %24 = vector.load %arg2[%c0_5, %c0_6, %c0_7] : memref<2x8x128xf32, #tpu.memory_space<vmem>>, vector<1x8x128xf32>
    %25 = vector.shape_cast %24 : vector<1x8x128xf32> to vector<8x128xf32>
    %c0_8 = arith.constant 0 : index
    %c0_9 = arith.constant 0 : index
    %c0_10 = arith.constant 0 : index
    %26 = vector.load %arg3[%c0_8, %c0_9, %c0_10] : memref<2x8x128xf32, #tpu.memory_space<vmem>>, vector<1x8x128xf32>
    %27 = vector.shape_cast %26 : vector<1x8x128xf32> to vector<8x128xf32>
    %28 = arith.subf %25, %27 : vector<8x128xf32>
    %29 = math.absf %28 : vector<8x128xf32>
    %cst_11 = arith.constant 1.000000e+00 : f32
    %30 = vector.broadcast %cst_11 : f32 to vector<8x128xf32>
    %31 = arith.cmpf olt, %29, %30 : vector<8x128xf32>
    %cst_12 = arith.constant 5.000000e-01 : f32
    %32 = vector.broadcast %cst_12 : f32 to vector<8x128xf32>
    %33 = arith.mulf %32, %28 : vector<8x128xf32>
    %34 = arith.mulf %33, %28 : vector<8x128xf32>
    %cst_13 = arith.constant 5.000000e-01 : f32
    %35 = vector.broadcast %cst_13 : f32 to vector<8x128xf32>
    %36 = arith.subf %29, %35 : vector<8x128xf32>
    %37 = arith.select %31, %34, %36 : vector<8x128xi1>, vector<8x128xf32>
    %38 = arith.addf %23, %37 : vector<8x128xf32>
    %c1 = arith.constant 1 : index
    %c0_14 = arith.constant 0 : index
    %c0_15 = arith.constant 0 : index
    %39 = vector.load %arg2[%c1, %c0_14, %c0_15] : memref<2x8x128xf32, #tpu.memory_space<vmem>>, vector<1x8x128xf32>
    %40 = vector.shape_cast %39 : vector<1x8x128xf32> to vector<8x128xf32>
    %c1_16 = arith.constant 1 : index
    %c0_17 = arith.constant 0 : index
    %c0_18 = arith.constant 0 : index
    %41 = vector.load %arg3[%c1_16, %c0_17, %c0_18] : memref<2x8x128xf32, #tpu.memory_space<vmem>>, vector<1x8x128xf32>
    %42 = vector.shape_cast %41 : vector<1x8x128xf32> to vector<8x128xf32>
    %43 = arith.subf %40, %42 : vector<8x128xf32>
    %44 = math.absf %43 : vector<8x128xf32>
    %cst_19 = arith.constant 1.000000e+00 : f32
    %45 = vector.broadcast %cst_19 : f32 to vector<8x128xf32>
    %46 = arith.cmpf olt, %44, %45 : vector<8x128xf32>
    %cst_20 = arith.constant 5.000000e-01 : f32
    %47 = vector.broadcast %cst_20 : f32 to vector<8x128xf32>
    %48 = arith.mulf %47, %43 : vector<8x128xf32>
    %49 = arith.mulf %48, %43 : vector<8x128xf32>
    %cst_21 = arith.constant 5.000000e-01 : f32
    %50 = vector.broadcast %cst_21 : f32 to vector<8x128xf32>
    %51 = arith.subf %44, %50 : vector<8x128xf32>
    %52 = arith.select %46, %49, %51 : vector<8x128xi1>, vector<8x128xf32>
    %53 = arith.addf %38, %52 : vector<8x128xf32>
    %cst_22 = arith.constant 0.000000e+00 : f32
    %54 = vector.broadcast %cst_22 : f32 to vector<8x128xf32>
    %55 = arith.select %19, %53, %54 : vector<8x128xi1>, vector<8x128xf32>
    %c0_23 = arith.constant 0 : index
    %c0_24 = arith.constant 0 : index
    %c0_25 = arith.constant 0 : index
    %56 = vector.load %arg4[%c0_23, %c0_24, %c0_25] : memref<5x8x128xf32, #tpu.memory_space<vmem>>, vector<1x8x128xf32>
    %57 = vector.shape_cast %56 : vector<1x8x128xf32> to vector<8x128xf32>
    %c1_26 = arith.constant 1 : index
    %c0_27 = arith.constant 0 : index
    %c0_28 = arith.constant 0 : index
    %58 = vector.load %arg4[%c1_26, %c0_27, %c0_28] : memref<5x8x128xf32, #tpu.memory_space<vmem>>, vector<1x8x128xf32>
    %59 = vector.shape_cast %58 : vector<1x8x128xf32> to vector<8x128xf32>
    %c2 = arith.constant 2 : index
    %c0_29 = arith.constant 0 : index
    %c0_30 = arith.constant 0 : index
    %60 = vector.load %arg4[%c2, %c0_29, %c0_30] : memref<5x8x128xf32, #tpu.memory_space<vmem>>, vector<1x8x128xf32>
    %61 = vector.shape_cast %60 : vector<1x8x128xf32> to vector<8x128xf32>
    %c3 = arith.constant 3 : index
    %c0_31 = arith.constant 0 : index
    %c0_32 = arith.constant 0 : index
    %62 = vector.load %arg4[%c3, %c0_31, %c0_32] : memref<5x8x128xf32, #tpu.memory_space<vmem>>, vector<1x8x128xf32>
    %63 = vector.shape_cast %62 : vector<1x8x128xf32> to vector<8x128xf32>
    %c4 = arith.constant 4 : index
    %c0_33 = arith.constant 0 : index
    %c0_34 = arith.constant 0 : index
    %64 = vector.load %arg4[%c4, %c0_33, %c0_34] : memref<5x8x128xf32, #tpu.memory_space<vmem>>, vector<1x8x128xf32>
    %65 = vector.shape_cast %64 : vector<1x8x128xf32> to vector<8x128xf32>
    %66 = arith.maximumf %57, %59 : vector<8x128xf32>
    %67 = arith.maximumf %66, %61 : vector<8x128xf32>
    %68 = arith.maximumf %67, %63 : vector<8x128xf32>
    %69 = arith.maximumf %68, %65 : vector<8x128xf32>
    %cst_35 = arith.constant 0.000000e+00 : f32
    %70 = vector.broadcast %cst_35 : f32 to vector<8x128xf32>
    %cst_36 = arith.constant 0.000000e+00 : f32
    %71 = vector.broadcast %cst_36 : f32 to vector<8x128xf32>
    %72 = arith.subf %57, %69 : vector<8x128xf32>
    %73 = math.exp %72 : vector<8x128xf32>
    %74 = arith.addf %70, %73 : vector<8x128xf32>
    %c0_i32_37 = arith.constant 0 : i32
    %75 = vector.broadcast %c0_i32_37 : i32 to vector<8x128xi32>
    %76 = arith.cmpi eq, %16, %75 : vector<8x128xi32>
    %cst_38 = arith.constant 0.000000e+00 : f32
    %77 = vector.broadcast %cst_38 : f32 to vector<8x128xf32>
    %78 = arith.select %76, %57, %77 : vector<8x128xi1>, vector<8x128xf32>
    %79 = arith.addf %71, %78 : vector<8x128xf32>
    %80 = arith.subf %59, %69 : vector<8x128xf32>
    %81 = math.exp %80 : vector<8x128xf32>
    %82 = arith.addf %74, %81 : vector<8x128xf32>
    %c1_i32 = arith.constant 1 : i32
    %83 = vector.broadcast %c1_i32 : i32 to vector<8x128xi32>
    %84 = arith.cmpi eq, %16, %83 : vector<8x128xi32>
    %cst_39 = arith.constant 0.000000e+00 : f32
    %85 = vector.broadcast %cst_39 : f32 to vector<8x128xf32>
    %86 = arith.select %84, %59, %85 : vector<8x128xi1>, vector<8x128xf32>
    %87 = arith.addf %79, %86 : vector<8x128xf32>
    %88 = arith.subf %61, %69 : vector<8x128xf32>
    %89 = math.exp %88 : vector<8x128xf32>
    %90 = arith.addf %82, %89 : vector<8x128xf32>
    %c2_i32 = arith.constant 2 : i32
    %91 = vector.broadcast %c2_i32 : i32 to vector<8x128xi32>
    %92 = arith.cmpi eq, %16, %91 : vector<8x128xi32>
    %cst_40 = arith.constant 0.000000e+00 : f32
    %93 = vector.broadcast %cst_40 : f32 to vector<8x128xf32>
    %94 = arith.select %92, %61, %93 : vector<8x128xi1>, vector<8x128xf32>
    %95 = arith.addf %87, %94 : vector<8x128xf32>
    %96 = arith.subf %63, %69 : vector<8x128xf32>
    %97 = math.exp %96 : vector<8x128xf32>
    %98 = arith.addf %90, %97 : vector<8x128xf32>
    %c3_i32 = arith.constant 3 : i32
    %99 = vector.broadcast %c3_i32 : i32 to vector<8x128xi32>
    %100 = arith.cmpi eq, %16, %99 : vector<8x128xi32>
    %cst_41 = arith.constant 0.000000e+00 : f32
    %101 = vector.broadcast %cst_41 : f32 to vector<8x128xf32>
    %102 = arith.select %100, %63, %101 : vector<8x128xi1>, vector<8x128xf32>
    %103 = arith.addf %95, %102 : vector<8x128xf32>
    %104 = arith.subf %65, %69 : vector<8x128xf32>
    %105 = math.exp %104 : vector<8x128xf32>
    %106 = arith.addf %98, %105 : vector<8x128xf32>
    %c4_i32 = arith.constant 4 : i32
    %107 = vector.broadcast %c4_i32 : i32 to vector<8x128xi32>
    %108 = arith.cmpi eq, %16, %107 : vector<8x128xi32>
    %cst_42 = arith.constant 0.000000e+00 : f32
    %109 = vector.broadcast %cst_42 : f32 to vector<8x128xf32>
    %110 = arith.select %108, %65, %109 : vector<8x128xi1>, vector<8x128xf32>
    %111 = arith.addf %103, %110 : vector<8x128xf32>
    %112 = math.log %106 : vector<8x128xf32>
    %113 = arith.addf %112, %69 : vector<8x128xf32>
    %114 = arith.subf %113, %111 : vector<8x128xf32>
    %c0_43 = arith.constant 0 : index
    %c0_44 = arith.constant 0 : index
    %115 = vector.load %arg6[%c0_43, %c0_44] : memref<8x128xf32, #tpu.memory_space<vmem>>, vector<1x128xf32>
    %116 = arith.extui %19 : vector<8x128xi1> to vector<8x128xi32>
    %117 = arith.sitofp %116 : vector<8x128xi32> to vector<8x128xf32>
    %cst_45 = arith.constant dense<0.000000e+00> : vector<128xf32>
    %118 = vector.multi_reduction <add>, %117, %cst_45 [0] : vector<8x128xf32> to vector<128xf32>
    %119 = vector.shape_cast %118 : vector<128xf32> to vector<1x128xf32>
    %120 = arith.addf %115, %119 : vector<1x128xf32>
    %c0_46 = arith.constant 0 : index
    %c0_47 = arith.constant 0 : index
    %121 = vector.load %arg6[%c0_46, %c0_47] : memref<8x128xf32, #tpu.memory_space<vmem>>, vector<1x128xf32>
    tpu.vector_store %arg6[%c0_46, %c0_47], %120 {strides = array<i32>} : memref<8x128xf32, #tpu.memory_space<vmem>>, vector<1x128xf32>,
    %c1_48 = arith.constant 1 : index
    %c0_49 = arith.constant 0 : index
    %122 = vector.load %arg6[%c1_48, %c0_49] : memref<8x128xf32, #tpu.memory_space<vmem>>, vector<1x128xf32>
    %123 = arith.extui %22 : vector<8x128xi1> to vector<8x128xi32>
    %124 = arith.sitofp %123 : vector<8x128xi32> to vector<8x128xf32>
    %cst_50 = arith.constant dense<0.000000e+00> : vector<128xf32>
    %125 = vector.multi_reduction <add>, %124, %cst_50 [0] : vector<8x128xf32> to vector<128xf32>
    %126 = vector.shape_cast %125 : vector<128xf32> to vector<1x128xf32>
    %127 = arith.addf %122, %126 : vector<1x128xf32>
    %c1_51 = arith.constant 1 : index
    %c0_52 = arith.constant 0 : index
    %128 = vector.load %arg6[%c1_51, %c0_52] : memref<8x128xf32, #tpu.memory_space<vmem>>, vector<1x128xf32>
    tpu.vector_store %arg6[%c1_51, %c0_52], %127 {strides = array<i32>} : memref<8x128xf32, #tpu.memory_space<vmem>>, vector<1x128xf32>,
    %c2_53 = arith.constant 2 : index
    %c0_54 = arith.constant 0 : index
    %129 = vector.load %arg6[%c2_53, %c0_54] : memref<8x128xf32, #tpu.memory_space<vmem>>, vector<1x128xf32>
    %cst_55 = arith.constant dense<0.000000e+00> : vector<128xf32>
    %130 = vector.multi_reduction <add>, %55, %cst_55 [0] : vector<8x128xf32> to vector<128xf32>
    %131 = vector.shape_cast %130 : vector<128xf32> to vector<1x128xf32>
    %132 = arith.addf %129, %131 : vector<1x128xf32>
    %c2_56 = arith.constant 2 : index
    %c0_57 = arith.constant 0 : index
    %133 = vector.load %arg6[%c2_56, %c0_57] : memref<8x128xf32, #tpu.memory_space<vmem>>, vector<1x128xf32>
    tpu.vector_store %arg6[%c2_56, %c0_57], %132 {strides = array<i32>} : memref<8x128xf32, #tpu.memory_space<vmem>>, vector<1x128xf32>,
    %c3_58 = arith.constant 3 : index
    %c0_59 = arith.constant 0 : index
    %134 = vector.load %arg6[%c3_58, %c0_59] : memref<8x128xf32, #tpu.memory_space<vmem>>, vector<1x128xf32>
    %cst_60 = arith.constant 0.000000e+00 : f32
    %135 = vector.broadcast %cst_60 : f32 to vector<8x128xf32>
    %136 = arith.select %19, %114, %135 : vector<8x128xi1>, vector<8x128xf32>
    %cst_61 = arith.constant dense<0.000000e+00> : vector<128xf32>
    %137 = vector.multi_reduction <add>, %136, %cst_61 [0] : vector<8x128xf32> to vector<128xf32>
    %138 = vector.shape_cast %137 : vector<128xf32> to vector<1x128xf32>
    %139 = arith.addf %134, %138 : vector<1x128xf32>
    %c3_62 = arith.constant 3 : index
    %c0_63 = arith.constant 0 : index
    %140 = vector.load %arg6[%c3_62, %c0_63] : memref<8x128xf32, #tpu.memory_space<vmem>>, vector<1x128xf32>
    tpu.vector_store %arg6[%c3_62, %c0_63], %139 {strides = array<i32>} : memref<8x128xf32, #tpu.memory_space<vmem>>, vector<1x128xf32>,
    %c4_64 = arith.constant 4 : index
    %c0_65 = arith.constant 0 : index
    %141 = vector.load %arg6[%c4_64, %c0_65] : memref<8x128xf32, #tpu.memory_space<vmem>>, vector<1x128xf32>
    %cst_66 = arith.constant 0.000000e+00 : f32
    %142 = vector.broadcast %cst_66 : f32 to vector<8x128xf32>
    %143 = arith.select %22, %114, %142 : vector<8x128xi1>, vector<8x128xf32>
    %cst_67 = arith.constant dense<0.000000e+00> : vector<128xf32>
    %144 = vector.multi_reduction <add>, %143, %cst_67 [0] : vector<8x128xf32> to vector<128xf32>
    %145 = vector.shape_cast %144 : vector<128xf32> to vector<1x128xf32>
    %146 = arith.addf %141, %145 : vector<1x128xf32>
    %c4_68 = arith.constant 4 : index
    %c0_69 = arith.constant 0 : index
    %147 = vector.load %arg6[%c4_68, %c0_69] : memref<8x128xf32, #tpu.memory_space<vmem>>, vector<1x128xf32>
    tpu.vector_store %arg6[%c4_68, %c0_69], %146 {strides = array<i32>} : memref<8x128xf32, #tpu.memory_space<vmem>>, vector<1x128xf32>,
    return
  }
  func.func @transform_0(%arg0: i32, %arg1: i32) -> (i32, i32, i32) {
    %c5_i32 = arith.constant 5 : i32
    %0 = arith.muli %arg0, %c5_i32 : i32
    %1 = arith.addi %0, %arg1 : i32
    %c4_i32 = arith.constant 4 : i32
    %2 = arith.minsi %1, %c4_i32 : i32
    %c0_i32 = arith.constant 0 : i32
    %c0_i32_0 = arith.constant 0 : i32
    %c0_i32_1 = arith.constant 0 : i32
    return %c0_i32, %2, %c0_i32_0 : i32, i32, i32
  }
  func.func @transform_1(%arg0: i32, %arg1: i32) -> (i32, i32, i32) {
    %c5_i32 = arith.constant 5 : i32
    %0 = arith.muli %arg0, %c5_i32 : i32
    %1 = arith.addi %0, %arg1 : i32
    %c4_i32 = arith.constant 4 : i32
    %2 = arith.minsi %1, %c4_i32 : i32
    %c0_i32 = arith.constant 0 : i32
    %c0_i32_0 = arith.constant 0 : i32
    %c0_i32_1 = arith.constant 0 : i32
    return %c0_i32, %2, %c0_i32_0 : i32, i32, i32
  }
  func.func @transform_2(%arg0: i32, %arg1: i32) -> (i32, i32, i32) {
    %c5_i32 = arith.constant 5 : i32
    %0 = arith.muli %arg0, %c5_i32 : i32
    %1 = arith.addi %0, %arg1 : i32
    %c4_i32 = arith.constant 4 : i32
    %2 = arith.minsi %1, %c4_i32 : i32
    %c0_i32 = arith.constant 0 : i32
    %c0_i32_0 = arith.constant 0 : i32
    %c0_i32_1 = arith.constant 0 : i32
    return %c0_i32, %2, %c0_i32_0 : i32, i32, i32
  }
  func.func @transform_3(%arg0: i32, %arg1: i32) -> (i32, i32, i32) {
    %c5_i32 = arith.constant 5 : i32
    %0 = arith.muli %arg0, %c5_i32 : i32
    %1 = arith.addi %0, %arg1 : i32
    %c4_i32 = arith.constant 4 : i32
    %2 = arith.minsi %1, %c4_i32 : i32
    %c0_i32 = arith.constant 0 : i32
    %c0_i32_0 = arith.constant 0 : i32
    %c0_i32_1 = arith.constant 0 : i32
    return %c0_i32, %2, %c0_i32_0 : i32, i32, i32
  }
  func.func @transform_4(%arg0: i32, %arg1: i32) -> (i32, i32) {
    %c0_i32 = arith.constant 0 : i32
    %c0_i32_0 = arith.constant 0 : i32
    return %arg0, %c0_i32 : i32, i32
  }
}

</mosaic_0001>

<llo_original>
// kernel: tpu_custom_call.1
$region0: #{tpu_custom_call.1}
  #allocation0 [shape = 'u32[]', space=smem, size = 0x4, offset = 0x4, fixed_abs, tag = 'smem constant byte address 0x4 - core index']
  #allocation1 [shape = 'u32[144,128]{1,0:T(1,128)}', space=vmem, size = 0x12000, scoped, tag = 'internal scratch']
  %s0 = inlined_call_operand.vmem [shape: f32[2,33,128], index: 0, kind: input, shape index: {}]
  %s1 = inlined_call_operand.vmem [shape: f32[2,33,128], index: 1, kind: input, shape index: {}]
  %s2 = inlined_call_operand.vmem [shape: f32[5,33,128], index: 2, kind: input, shape index: {}]
  %s3 = inlined_call_operand.vmem [shape: s32[1,33,128], index: 3, kind: input, shape index: {}]
  %s4 = inlined_call_operand.hbm [shape: f32[8,128], index: 4, kind: output, shape index: {}]
  %s5 = sld [smem:[#allocation0]]
  $region167: #{tpu_custom_call.1} parent=0
    _
  %s7 = ssub.s32 1, %s5
  %s8 = scalar_select 0, %s7, %s5
  $region1: #{tpu_custom_call.1} parent=0
    #allocation2 [shape = 'u8[16384]{0}', space=vmem, size = 0x4000, scoped, tag = 'input window, operand 0']
    #allocation3 [shape = 'u8[16384]{0}', space=vmem, size = 0x4000, scoped, tag = 'input window, operand 1']
    #allocation4 [shape = 'u8[40960]{0}', space=vmem, size = 0xa000, scoped, tag = 'input window, operand 2']
    #allocation5 [shape = 'u8[4096]{0}', space=vmem, size = 0x1000, scoped, tag = 'output window, operand 0, single buffered']
    #allocation6 [shape = 's32[2]{0}', space=sflag, size = 0x8, scoped, tag = 'scoped memory for tpu_custom_call.1']
    %9 = vsyncpa [#allocation6], 0
    loop: start=0, step=1, limit=7
    $region2: #{tpu_custom_call.1} parent=1 // loop_pre_header
      _
    $region3: #{tpu_custom_call.1} parent=1 // loop_header
      %s11 = sphi 0, %s15
      %p12 = scmp.ge.s32.totalorder %s11, 7
      %s18 = sphi 0, %s30
      %s19 = sphi 0, %s26
      %s20 = sphi 0, %s18
      %s21 = sphi 0, %s19
      %s22 = sphi 0, %s20
      %s23 = sphi 0, %s21
      %s41 = sphi 0, %s43
      %s44 = sphi 0, %s41
      %s45 = sphi 0, %s44
      %s61 = sphi 0, %s45
      %s75 = sphi 0, %s77
      %s78 = sphi 0, %s75
      %s79 = sphi 0, %s78
      %s95 = sphi 0, %s79
      %s109 = sphi 0, %s111
      %s112 = sphi 0, %s109
      %s113 = sphi 0, %s112
      %s129 = sphi 0, %s113
      %s143 = sphi 0, %s145
      %s146 = sphi 0, %s143
      %s147 = sphi 0, %s146
      %s163 = sphi 0, %s147
      %s169 = sphi 0, %s171
      %s172 = sphi 0, %s169
      %s173 = sphi 0, %s172
      %s189 = sphi 0, %s173
    $region4: #{tpu_custom_call.1} parent=1 // loop_header_branch
      %14 = sbr.rel (%p12) target = $region8
    $region5: #{tpu_custom_call.1} parent=1 // loop_body
      %s16 = ssub.s32 %s11, 1
      %s17 = ssub.s32 %s11, 2
      %s24 = sadd.s32 1, %s19
      %p25 = scmp.ge.s32.totalorder %s24, 5
      %s26 = scalar_select %p25, 0, %s24
      %s27 = sadd.s32 1, %s18
      %s28 = scalar_select %p25, %s27, %s18
      %p29 = scmp.ge.s32.totalorder %s28, 1
      %s30 = scalar_select %p29, 0, %s28
      %s31 = smul.u32 %s18, 5
      %s32 = sadd.s32 %s31, %s19
      %p33 = scmp.lt.s32.totalorder %s32, 4
      %s34 = scalar_select %p33, %s32, 4
      %s35 = smul.u32 %s30, 5
      %s36 = sadd.s32 %s35, %s26
      %p37 = scmp.lt.s32.totalorder %s36, 4
      %s38 = scalar_select %p37, %s36, 4
      %s39 = ssub.s32 %s34, %s38
      %p40 = scmp.eq.s32.totalorder %s39, 0
      %s42 = sadd.s32 %s41, 1
      %s43 = scalar_select %p40, %s41, %s42
      %p46 = pneg %p40
      %p47 = scmp.eq.s32.totalorder %s11, 4
      %p48 = por %p46, %p47
      %p49 = scmp.ne.s32.totalorder %s41, %s44
      %p50 = scmp.eq.s32.totalorder %s11, 0
      %p51 = por %p49, %p50
      %p52 = scmp.ne.s32.totalorder %s41, %s44
      %p53 = scmp.eq.s32.totalorder %s16, 4
      %p54 = por %p52, %p53
      %p55 = scmp.ne.s32.totalorder %s44, %s45
      %p56 = scmp.eq.s32.totalorder %s16, 0
      %p57 = por %p55, %p56
      %p58 = scmp.ne.s32.totalorder %s44, %s45
      %p59 = scmp.eq.s32.totalorder %s17, 4
      %p60 = por %p58, %p59
      %p62 = scmp.ne.s32.totalorder %s45, %s61
      %p63 = scmp.eq.s32.totalorder %s17, 0
      %p64 = por %p62, %p63
      %s65 = smul.u32 %s18, 5
      %s66 = sadd.s32 %s65, %s19
      %p67 = scmp.lt.s32.totalorder %s66, 4
      %s68 = scalar_select %p67, %s66, 4
      %s69 = smul.u32 %s30, 5
      %s70 = sadd.s32 %s69, %s26
      %p71 = scmp.lt.s32.totalorder %s70, 4
      %s72 = scalar_select %p71, %s70, 4
      %s73 = ssub.s32 %s68, %s72
      %p74 = scmp.eq.s32.totalorder %s73, 0
      %s76 = sadd.s32 %s75, 1
      %s77 = scalar_select %p74, %s75, %s76
      %p80 = pneg %p74
      %p81 = scmp.eq.s32.totalorder %s11, 4
      %p82 = por %p80, %p81
      %p83 = scmp.ne.s32.totalorder %s75, %s78
      %p84 = scmp.eq.s32.totalorder %s11, 0
      %p85 = por %p83, %p84
      %p86 = scmp.ne.s32.totalorder %s75, %s78
      %p87 = scmp.eq.s32.totalorder %s16, 4
      %p88 = por %p86, %p87
      %p89 = scmp.ne.s32.totalorder %s78, %s79
      %p90 = scmp.eq.s32.totalorder %s16, 0
      %p91 = por %p89, %p90
      %p92 = scmp.ne.s32.totalorder %s78, %s79
      %p93 = scmp.eq.s32.totalorder %s17, 4
      %p94 = por %p92, %p93
      %p96 = scmp.ne.s32.totalorder %s79, %s95
      %p97 = scmp.eq.s32.totalorder %s17, 0
      %p98 = por %p96, %p97
      %s99 = smul.u32 %s18, 5
      %s100 = sadd.s32 %s99, %s19
      %p101 = scmp.lt.s32.totalorder %s100, 4
      %s102 = scalar_select %p101, %s100, 4
      %s103 = smul.u32 %s30, 5
      %s104 = sadd.s32 %s103, %s26
      %p105 = scmp.lt.s32.totalorder %s104, 4
      %s106 = scalar_select %p105, %s104, 4
      %s107 = ssub.s32 %s102, %s106
      %p108 = scmp.eq.s32.totalorder %s107, 0
      %s110 = sadd.s32 %s109, 1
      %s111 = scalar_select %p108, %s109, %s110
      %p114 = pneg %p108
      %p115 = scmp.eq.s32.totalorder %s11, 4
      %p116 = por %p114, %p115
      %p117 = scmp.ne.s32.totalorder %s109, %s112
      %p118 = scmp.eq.s32.totalorder %s11, 0
      %p119 = por %p117, %p118
      %p120 = scmp.ne.s32.totalorder %s109, %s112
      %p121 = scmp.eq.s32.totalorder %s16, 4
      %p122 = por %p120, %p121
      %p123 = scmp.ne.s32.totalorder %s112, %s113
      %p124 = scmp.eq.s32.totalorder %s16, 0
      %p125 = por %p123, %p124
      %p126 = scmp.ne.s32.totalorder %s112, %s113
      %p127 = scmp.eq.s32.totalorder %s17, 4
      %p128 = por %p126, %p127
      %p130 = scmp.ne.s32.totalorder %s113, %s129
      %p131 = scmp.eq.s32.totalorder %s17, 0
      %p132 = por %p130, %p131
      %s133 = smul.u32 %s18, 5
      %s134 = sadd.s32 %s133, %s19
      %p135 = scmp.lt.s32.totalorder %s134, 4
      %s136 = scalar_select %p135, %s134, 4
      %s137 = smul.u32 %s30, 5
      %s138 = sadd.s32 %s137, %s26
      %p139 = scmp.lt.s32.totalorder %s138, 4
      %s140 = scalar_select %p139, %s138, 4
      %s141 = ssub.s32 %s136, %s140
      %p142 = scmp.eq.s32.totalorder %s141, 0
      %s144 = sadd.s32 %s143, 1
      %s145 = scalar_select %p142, %s143, %s144
      %p148 = pneg %p142
      %p149 = scmp.eq.s32.totalorder %s11, 4
      %p150 = por %p148, %p149
      %p151 = scmp.ne.s32.totalorder %s143, %s146
      %p152 = scmp.eq.s32.totalorder %s11, 0
      %p153 = por %p151, %p152
      %p154 = scmp.ne.s32.totalorder %s143, %s146
      %p155 = scmp.eq.s32.totalorder %s16, 4
      %p156 = por %p154, %p155
      %p157 = scmp.ne.s32.totalorder %s146, %s147
      %p158 = scmp.eq.s32.totalorder %s16, 0
      %p159 = por %p157, %p158
      %p160 = scmp.ne.s32.totalorder %s146, %s147
      %p161 = scmp.eq.s32.totalorder %s17, 4
      %p162 = por %p160, %p161
      %p164 = scmp.ne.s32.totalorder %s147, %s163
      %p165 = scmp.eq.s32.totalorder %s17, 0
      %p166 = por %p164, %p165
      %s167 = ssub.s32 %s18, %s30
      %p168 = scmp.eq.s32.totalorder %s167, 0
      %s170 = sadd.s32 %s169, 1
      %s171 = scalar_select %p168, %s169, %s170
      %p174 = pneg %p168
      %p175 = scmp.eq.s32.totalorder %s11, 4
      %p176 = por %p174, %p175
      %p177 = scmp.ne.s32.totalorder %s169, %s172
      %p178 = scmp.eq.s32.totalorder %s11, 0
      %p179 = por %p177, %p178
      %p180 = scmp.ne.s32.totalorder %s169, %s172
      %p181 = scmp.eq.s32.totalorder %s16, 4
      %p182 = por %p180, %p181
      %p183 = scmp.ne.s32.totalorder %s172, %s173
      %p184 = scmp.eq.s32.totalorder %s16, 0
      %p185 = por %p183, %p184
      %p186 = scmp.ne.s32.totalorder %s172, %s173
      %p187 = scmp.eq.s32.totalorder %s17, 4
      %p188 = por %p186, %p187
      %p190 = scmp.ne.s32.totalorder %s173, %s189
      %p191 = scmp.eq.s32.totalorder %s17, 0
      %p192 = por %p190, %p191
      %p193 = scmp.le.s32.totalorder 1, %s11
      %p194 = scmp.lt.s32.totalorder %s11, 6
      %p195 = pnand %p193, %p194
      %p196 = pneg %p195
      // Predicated region
      $region9: #{tpu_custom_call.1} parent=5 // pred_check
        _
      $region10: #{tpu_custom_call.1} parent=5 // pred_check_branch
        %198 = sbr.rel (%p195) target = $region12
      $region11: #{tpu_custom_call.1} parent=5 // pred_region
        %s199 = ssub.s32 %s11, 1
      $region12: #{tpu_custom_call.1} parent=5 // pred_fallthru
        _
      %p200 = scmp.lt.s32.totalorder %s11, 5
      // Predicated region
      $region13: #{tpu_custom_call.1} parent=5 // pred_check
        %p201 = pneg %p200
      $region14: #{tpu_custom_call.1} parent=5 // pred_check_branch
        %203 = sbr.rel (%p201) target = $region16
      $region15: #{tpu_custom_call.1} parent=5 // pred_region
        // Predicated region
        $region17: #{tpu_custom_call.1} parent=15 // pred_check
          %p204 = pneg %p51
        $region18: #{tpu_custom_call.1} parent=15 // pred_check_branch
          %206 = sbr.rel (%p204) target = $region20
        $region19: #{tpu_custom_call.1} parent=15 // pred_region
          %s207 = sand.u32 %s41, 1
          %s208 = sand.u32 %s41, 1
          %s209 = smul.addr %s208, 16
          %s210 = scalar_lea.vmem [#allocation2], %s209
          %s211 = smul.u32 %s18, 5
          %s212 = sadd.s32 %s211, %s19
          %p213 = scmp.lt.s32.totalorder %s212, 4
          %s214 = scalar_select %p213, %s212, 4
          %s215 = smul.addr %s214, 8
          %s216 = scalar_lea.vmem %s0, %s215
          // Predicated region
          $region21: #{tpu_custom_call.1} parent=19 // pred_check
            _
          $region22: #{tpu_custom_call.1} parent=19 // pred_check_branch
            %218 = sbr.rel (0) target = $region24
          $region23: #{tpu_custom_call.1} parent=19 // pred_region
            // Predicated region
            $region25: #{tpu_custom_call.1} parent=23 // pred_check
              _
            $region26: #{tpu_custom_call.1} parent=23 // pred_check_branch
              %220 = sbr.rel (0) target = $region28
            $region27: #{tpu_custom_call.1} parent=23 // pred_region
              // Predicated region
              $region40: #{tpu_custom_call.1} parent=27 // pred_check
                _
              $region41: #{tpu_custom_call.1} parent=27 // pred_check_branch
                %238 = sbr.rel (0) target = $region43
              $region42: #{tpu_custom_call.1} parent=27 // pred_region
                loop: start=0, step=1, limit=1
                $region44: #{tpu_custom_call.1} parent=42 // loop_pre_header
                  _
                $region45: #{tpu_custom_call.1} parent=42 // loop_header
                  %s240 = sphi 0, %s244
                  %p241 = scmp.ge.s32.totalorder %s240, 1
                  %s245 = sphi %s216, %s216
                  %s246 = sphi %s210, %s210
                $region46: #{tpu_custom_call.1} parent=42 // loop_header_branch
                  %243 = sbr.rel (%p241) target = $region50
                $region47: #{tpu_custom_call.1} parent=42 // loop_body
                  %v247 = vld [vmem:[%s245] sm:$0xff]
                  %248 = vst [vmem:[%s246] sm:$0xff] %v247
                  %v249 = vld [vmem:[%s245 + $0x28] sm:$0xff]
                  %250 = vst [vmem:[%s246 + $0x8] sm:$0xff] %v249
                $region48: #{tpu_custom_call.1} parent=42 // loop_footer
                  %s244 = sadd.s32 1, %s240
                $region49: #{tpu_custom_call.1} parent=42 // loop_footer_branch
                  %239 = sbr.rel target = $region45
                $region50: #{tpu_custom_call.1} parent=42 // loop_exit
                  _
              $region43: #{tpu_custom_call.1} parent=27 // pred_fallthru
                _
              // Predicated region
              $region51: #{tpu_custom_call.1} parent=27 // pred_check
                _
              $region52: #{tpu_custom_call.1} parent=27 // pred_check_branch
                %252 = sbr.rel target = $region54
              $region53: #{tpu_custom_call.1} parent=27 // pred_region
                _
              $region54: #{tpu_custom_call.1} parent=27 // pred_fallthru
                _
            $region28: #{tpu_custom_call.1} parent=23 // pred_fallthru
              _
            // Predicated region
            $region29: #{tpu_custom_call.1} parent=23 // pred_check
              _
            $region30: #{tpu_custom_call.1} parent=23 // pred_check_branch
              %222 = sbr.rel target = $region32
            $region31: #{tpu_custom_call.1} parent=23 // pred_region
              %s224 = ssub.s32 256, 1
              loop: start=0, step=1, limit=1
              $region33: #{tpu_custom_call.1} parent=31 // loop_pre_header
                _
              $region34: #{tpu_custom_call.1} parent=31 // loop_header
                %s226 = sphi 0, %s230
                %p227 = scmp.ge.s32.totalorder %s226, 1
                %s231 = sphi %s216, %s216
                %s232 = sphi %s210, %s210
              $region35: #{tpu_custom_call.1} parent=31 // loop_header_branch
                %229 = sbr.rel (%p227) target = $region39
              $region36: #{tpu_custom_call.1} parent=31 // loop_body
                %v233 = vld [vmem:[%s231] sm:%s224]
                %234 = vst [vmem:[%s232] sm:%s224] %v233
                %v235 = vld [vmem:[%s231 + $0x28] sm:%s224]
                %236 = vst [vmem:[%s232 + $0x8] sm:%s224] %v235
              $region37: #{tpu_custom_call.1} parent=31 // loop_footer
                %s230 = sadd.s32 1, %s226
              $region38: #{tpu_custom_call.1} parent=31 // loop_footer_branch
                %225 = sbr.rel target = $region34
              $region39: #{tpu_custom_call.1} parent=31 // loop_exit
                _
            $region32: #{tpu_custom_call.1} parent=23 // pred_fallthru
              _
          $region24: #{tpu_custom_call.1} parent=19 // pred_fallthru
            _
          %253 = vnop
        $region20: #{tpu_custom_call.1} parent=15 // pred_fallthru
          _
        // Predicated region
        $region55: #{tpu_custom_call.1} parent=15 // pred_check
          %p254 = pneg %p85
        $region56: #{tpu_custom_call.1} parent=15 // pred_check_branch
          %256 = sbr.rel (%p254) target = $region58
        $region57: #{tpu_custom_call.1} parent=15 // pred_region
          %s257 = sand.u32 %s75, 1
          %s258 = sand.u32 %s75, 1
          %s259 = smul.addr %s258, 16
          %s260 = scalar_lea.vmem [#allocation3], %s259
          %s261 = smul.u32 %s18, 5
          %s262 = sadd.s32 %s261, %s19
          %p263 = scmp.lt.s32.totalorder %s262, 4
          %s264 = scalar_select %p263, %s262, 4
          %s265 = smul.addr %s264, 8
          %s266 = scalar_lea.vmem %s1, %s265
          // Predicated region
          $region59: #{tpu_custom_call.1} parent=57 // pred_check
            _
          $region60: #{tpu_custom_call.1} parent=57 // pred_check_branch
            %268 = sbr.rel (0) target = $region62
          $region61: #{tpu_custom_call.1} parent=57 // pred_region
            // Predicated region
            $region63: #{tpu_custom_call.1} parent=61 // pred_check
              _
            $region64: #{tpu_custom_call.1} parent=61 // pred_check_branch
              %270 = sbr.rel (0) target = $region66
            $region65: #{tpu_custom_call.1} parent=61 // pred_region
              // Predicated region
              $region78: #{tpu_custom_call.1} parent=65 // pred_check
                _
              $region79: #{tpu_custom_call.1} parent=65 // pred_check_branch
                %288 = sbr.rel (0) target = $region81
              $region80: #{tpu_custom_call.1} parent=65 // pred_region
                loop: start=0, step=1, limit=1
                $region82: #{tpu_custom_call.1} parent=80 // loop_pre_header
                  _
                $region83: #{tpu_custom_call.1} parent=80 // loop_header
                  %s290 = sphi 0, %s294
                  %p291 = scmp.ge.s32.totalorder %s290, 1
                  %s295 = sphi %s266, %s266
                  %s296 = sphi %s260, %s260
                $region84: #{tpu_custom_call.1} parent=80 // loop_header_branch
                  %293 = sbr.rel (%p291) target = $region88
                $region85: #{tpu_custom_call.1} parent=80 // loop_body
                  %v297 = vld [vmem:[%s295] sm:$0xff]
                  %298 = vst [vmem:[%s296] sm:$0xff] %v297
                  %v299 = vld [vmem:[%s295 + $0x28] sm:$0xff]
                  %300 = vst [vmem:[%s296 + $0x8] sm:$0xff] %v299
                $region86: #{tpu_custom_call.1} parent=80 // loop_footer
                  %s294 = sadd.s32 1, %s290
                $region87: #{tpu_custom_call.1} parent=80 // loop_footer_branch
                  %289 = sbr.rel target = $region83
                $region88: #{tpu_custom_call.1} parent=80 // loop_exit
                  _
              $region81: #{tpu_custom_call.1} parent=65 // pred_fallthru
                _
              // Predicated region
              $region89: #{tpu_custom_call.1} parent=65 // pred_check
                _
              $region90: #{tpu_custom_call.1} parent=65 // pred_check_branch
                %302 = sbr.rel target = $region92
              $region91: #{tpu_custom_call.1} parent=65 // pred_region
                _
              $region92: #{tpu_custom_call.1} parent=65 // pred_fallthru
                _
            $region66: #{tpu_custom_call.1} parent=61 // pred_fallthru
              _
            // Predicated region
            $region67: #{tpu_custom_call.1} parent=61 // pred_check
              _
            $region68: #{tpu_custom_call.1} parent=61 // pred_check_branch
              %272 = sbr.rel target = $region70
            $region69: #{tpu_custom_call.1} parent=61 // pred_region
              %s274 = ssub.s32 256, 1
              loop: start=0, step=1, limit=1
              $region71: #{tpu_custom_call.1} parent=69 // loop_pre_header
                _
              $region72: #{tpu_custom_call.1} parent=69 // loop_header
                %s276 = sphi 0, %s280
                %p277 = scmp.ge.s32.totalorder %s276, 1
                %s281 = sphi %s266, %s266
                %s282 = sphi %s260, %s260
              $region73: #{tpu_custom_call.1} parent=69 // loop_header_branch
                %279 = sbr.rel (%p277) target = $region77
              $region74: #{tpu_custom_call.1} parent=69 // loop_body
                %v283 = vld [vmem:[%s281] sm:%s274]
                %284 = vst [vmem:[%s282] sm:%s274] %v283
                %v285 = vld [vmem:[%s281 + $0x28] sm:%s274]
                %286 = vst [vmem:[%s282 + $0x8] sm:%s274] %v285
              $region75: #{tpu_custom_call.1} parent=69 // loop_footer
                %s280 = sadd.s32 1, %s276
              $region76: #{tpu_custom_call.1} parent=69 // loop_footer_branch
                %275 = sbr.rel target = $region72
              $region77: #{tpu_custom_call.1} parent=69 // loop_exit
                _
            $region70: #{tpu_custom_call.1} parent=61 // pred_fallthru
              _
          $region62: #{tpu_custom_call.1} parent=57 // pred_fallthru
            _
          %303 = vnop
        $region58: #{tpu_custom_call.1} parent=15 // pred_fallthru
          _
        // Predicated region
        $region93: #{tpu_custom_call.1} parent=15 // pred_check
          %p304 = pneg %p119
        $region94: #{tpu_custom_call.1} parent=15 // pred_check_branch
          %306 = sbr.rel (%p304) target = $region96
        $region95: #{tpu_custom_call.1} parent=15 // pred_region
          %s307 = sand.u32 %s109, 1
          %s308 = sand.u32 %s109, 1
          %s309 = smul.addr %s308, 40
          %s310 = scalar_lea.vmem [#allocation4], %s309
          %s311 = smul.u32 %s18, 5
          %s312 = sadd.s32 %s311, %s19
          %p313 = scmp.lt.s32.totalorder %s312, 4
          %s314 = scalar_select %p313, %s312, 4
          %s315 = smul.addr %s314, 8
          %s316 = scalar_lea.vmem %s2, %s315
          // Predicated region
          $region97: #{tpu_custom_call.1} parent=95 // pred_check
            _
          $region98: #{tpu_custom_call.1} parent=95 // pred_check_branch
            %318 = sbr.rel (0) target = $region100
          $region99: #{tpu_custom_call.1} parent=95 // pred_region
            // Predicated region
            $region101: #{tpu_custom_call.1} parent=99 // pred_check
              _
            $region102: #{tpu_custom_call.1} parent=99 // pred_check_branch
              %320 = sbr.rel (0) target = $region104
            $region103: #{tpu_custom_call.1} parent=99 // pred_region
              // Predicated region
              $region116: #{tpu_custom_call.1} parent=103 // pred_check
                _
              $region117: #{tpu_custom_call.1} parent=103 // pred_check_branch
                %344 = sbr.rel (0) target = $region119
              $region118: #{tpu_custom_call.1} parent=103 // pred_region
                loop: start=0, step=1, limit=1
                $region120: #{tpu_custom_call.1} parent=118 // loop_pre_header
                  _
                $region121: #{tpu_custom_call.1} parent=118 // loop_header
                  %s346 = sphi 0, %s350
                  %p347 = scmp.ge.s32.totalorder %s346, 1
                  %s351 = sphi %s316, %s316
                  %s352 = sphi %s310, %s310
                $region122: #{tpu_custom_call.1} parent=118 // loop_header_branch
                  %349 = sbr.rel (%p347) target = $region126
                $region123: #{tpu_custom_call.1} parent=118 // loop_body
                  %v353 = vld [vmem:[%s351] sm:$0xff]
                  %354 = vst [vmem:[%s352] sm:$0xff] %v353
                  %v355 = vld [vmem:[%s351 + $0x28] sm:$0xff]
                  %356 = vst [vmem:[%s352 + $0x8] sm:$0xff] %v355
                  %v357 = vld [vmem:[%s351 + $0x50] sm:$0xff]
                  %358 = vst [vmem:[%s352 + $0x10] sm:$0xff] %v357
                  %v359 = vld [vmem:[%s351 + $0x78] sm:$0xff]
                  %360 = vst [vmem:[%s352 + $0x18] sm:$0xff] %v359
                  %v361 = vld [vmem:[%s351 + $0xa0] sm:$0xff]
                  %362 = vst [vmem:[%s352 + $0x20] sm:$0xff] %v361
                $region124: #{tpu_custom_call.1} parent=118 // loop_footer
                  %s350 = sadd.s32 1, %s346
                $region125: #{tpu_custom_call.1} parent=118 // loop_footer_branch
                  %345 = sbr.rel target = $region121
                $region126: #{tpu_custom_call.1} parent=118 // loop_exit
                  _
              $region119: #{tpu_custom_call.1} parent=103 // pred_fallthru
                _
              // Predicated region
              $region127: #{tpu_custom_call.1} parent=103 // pred_check
                _
              $region128: #{tpu_custom_call.1} parent=103 // pred_check_branch
                %364 = sbr.rel target = $region130
              $region129: #{tpu_custom_call.1} parent=103 // pred_region
                _
              $region130: #{tpu_custom_call.1} parent=103 // pred_fallthru
                _
            $region104: #{tpu_custom_call.1} parent=99 // pred_fallthru
              _
            // Predicated region
            $region105: #{tpu_custom_call.1} parent=99 // pred_check
              _
            $region106: #{tpu_custom_call.1} parent=99 // pred_check_branch
              %322 = sbr.rel target = $region108
            $region107: #{tpu_custom_call.1} parent=99 // pred_region
              %s324 = ssub.s32 256, 1
              loop: start=0, step=1, limit=1
              $region109: #{tpu_custom_call.1} parent=107 // loop_pre_header
                _
              $region110: #{tpu_custom_call.1} parent=107 // loop_header
                %s326 = sphi 0, %s330
                %p327 = scmp.ge.s32.totalorder %s326, 1
                %s331 = sphi %s316, %s316
                %s332 = sphi %s310, %s310
              $region111: #{tpu_custom_call.1} parent=107 // loop_header_branch
                %329 = sbr.rel (%p327) target = $region115
              $region112: #{tpu_custom_call.1} parent=107 // loop_body
                %v333 = vld [vmem:[%s331] sm:%s324]
                %334 = vst [vmem:[%s332] sm:%s324] %v333
                %v335 = vld [vmem:[%s331 + $0x28] sm:%s324]
                %336 = vst [vmem:[%s332 + $0x8] sm:%s324] %v335
                %v337 = vld [vmem:[%s331 + $0x50] sm:%s324]
                %338 = vst [vmem:[%s332 + $0x10] sm:%s324] %v337
                %v339 = vld [vmem:[%s331 + $0x78] sm:%s324]
                %340 = vst [vmem:[%s332 + $0x18] sm:%s324] %v339
                %v341 = vld [vmem:[%s331 + $0xa0] sm:%s324]
                %342 = vst [vmem:[%s332 + $0x20] sm:%s324] %v341
              $region113: #{tpu_custom_call.1} parent=107 // loop_footer
                %s330 = sadd.s32 1, %s326
              $region114: #{tpu_custom_call.1} parent=107 // loop_footer_branch
                %325 = sbr.rel target = $region110
              $region115: #{tpu_custom_call.1} parent=107 // loop_exit
                _
            $region108: #{tpu_custom_call.1} parent=99 // pred_fallthru
              _
          $region100: #{tpu_custom_call.1} parent=95 // pred_fallthru
            _
          %365 = vnop
        $region96: #{tpu_custom_call.1} parent=15 // pred_fallthru
          _
        // Predicated region
        $region131: #{tpu_custom_call.1} parent=15 // pred_check
          %p366 = pneg %p153
        $region132: #{tpu_custom_call.1} parent=15 // pred_check_branch
          %368 = sbr.rel (%p366) target = $region134
        $region133: #{tpu_custom_call.1} parent=15 // pred_region
          %s369 = smul.u32 %s18, 5
          %s370 = sadd.s32 %s369, %s19
          %p371 = scmp.lt.s32.totalorder %s370, 4
          %s372 = scalar_select %p371, %s370, 4
          %p373 = scmp.lt.s32.totalorder %s372, 4
          %s374 = scalar_select %p373, %s372, 4
          %s375 = smul.addr %s374, 8
          %s376 = scalar_lea.vmem %s3, %s375
          %s377 = smul.u32 %s18, 5
          %s378 = sadd.s32 %s377, %s19
          %p379 = scmp.lt.s32.totalorder %s378, 4
          %s380 = scalar_select %p379, %s378, 4
        $region134: #{tpu_custom_call.1} parent=15 // pred_fallthru
          _
      $region16: #{tpu_custom_call.1} parent=5 // pred_fallthru
        _
      %p381 = scmp.le.s32.totalorder 1, %s11
      %p382 = scmp.lt.s32.totalorder %s11, 6
      %p383 = pnand %p381, %p382
      %p384 = pneg %p383
      // Predicated region
      $region135: #{tpu_custom_call.1} parent=5 // pred_check
        _
      $region136: #{tpu_custom_call.1} parent=5 // pred_check_branch
        %386 = sbr.rel (%p383) target = $region138
      $region137: #{tpu_custom_call.1} parent=5 // pred_region
        %s387 = ssub.s32 %s11, 1
        %s388 = sand.u32 %s44, 1
        %s389 = sand.u32 %s44, 1
        %s390 = smul.addr %s389, 16
        %s391 = scalar_lea.vmem [#allocation2], %s390
        // Predicated region
        $region139: #{tpu_custom_call.1} parent=137 // pred_check
          %p392 = pneg %p57
        $region140: #{tpu_custom_call.1} parent=137 // pred_check_branch
          %394 = sbr.rel (%p392) target = $region142
        $region141: #{tpu_custom_call.1} parent=137 // pred_region
          _
        $region142: #{tpu_custom_call.1} parent=137 // pred_fallthru
          _
        %s395 = sand.u32 %s78, 1
        %s396 = sand.u32 %s78, 1
        %s397 = smul.addr %s396, 16
        %s398 = scalar_lea.vmem [#allocation3], %s397
        // Predicated region
        $region143: #{tpu_custom_call.1} parent=137 // pred_check
          %p399 = pneg %p91
        $region144: #{tpu_custom_call.1} parent=137 // pred_check_branch
          %401 = sbr.rel (%p399) target = $region146
        $region145: #{tpu_custom_call.1} parent=137 // pred_region
          _
        $region146: #{tpu_custom_call.1} parent=137 // pred_fallthru
          _
        %s402 = sand.u32 %s112, 1
        %s403 = sand.u32 %s112, 1
        %s404 = smul.addr %s403, 40
        %s405 = scalar_lea.vmem [#allocation4], %s404
        // Predicated region
        $region147: #{tpu_custom_call.1} parent=137 // pred_check
          %p406 = pneg %p125
        $region148: #{tpu_custom_call.1} parent=137 // pred_check_branch
          %408 = sbr.rel (%p406) target = $region150
        $region149: #{tpu_custom_call.1} parent=137 // pred_region
          _
        $region150: #{tpu_custom_call.1} parent=137 // pred_fallthru
          _
        %s409 = sand.u32 %s44, 1
        %s410 = sand.u32 %s44, 1
        %s411 = smul.addr %s410, 16
        %s412 = scalar_lea.vmem [#allocation2], %s411
        %p413 = pneg %p57
        %p414 = pneg %p54
        %s415 = sand.u32 %s78, 1
        %s416 = sand.u32 %s78, 1
        %s417 = smul.addr %s416, 16
        %s418 = scalar_lea.vmem [#allocation3], %s417
        %p419 = pneg %p91
        %p420 = pneg %p88
        %s421 = sand.u32 %s112, 1
        %s422 = sand.u32 %s112, 1
        %s423 = smul.addr %s422, 40
        %s424 = scalar_lea.vmem [#allocation4], %s423
        %p425 = pneg %p125
        %p426 = pneg %p122
        %s427 = smul.u32 %s20, 5
        %s428 = sadd.s32 %s427, %s21
        %p429 = scmp.lt.s32.totalorder %s428, 4
        %s430 = scalar_select %p429, %s428, 4
        %p431 = scmp.lt.s32.totalorder %s430, 4
        %s432 = scalar_select %p431, %s430, 4
        %s433 = smul.addr %s432, 8
        %s434 = scalar_lea.vmem %s3, %s433
        %p435 = pneg %p159
        %p436 = pneg %p156
        %p437 = pneg %p185
        %p438 = pneg %p182
        %s439 = smul.u32 %s20, 5
        %s440 = sadd.s32 %s439, %s21
        %p441 = scmp.lt.s32.totalorder %s440, 4
        %s442 = scalar_select %p441, %s440, 4
        %s443 = smul.u32 %s20, 5
        %s444 = sadd.s32 %s443, %s21
        %p445 = scmp.lt.s32.totalorder %s444, 4
        %s446 = scalar_select %p445, %s444, 4
        %s447 = smul.u32 %s20, 5
        %s448 = sadd.s32 %s447, %s21
        %p449 = scmp.lt.s32.totalorder %s448, 4
        %s450 = scalar_select %p449, %s448, 4
        %s451 = smul.u32 %s20, 5
        %s452 = sadd.s32 %s451, %s21
        %p453 = scmp.lt.s32.totalorder %s452, 4
        %s454 = scalar_select %p453, %s452, 4
        %p455 = scmp.lt.s32.totalorder %s454, 4
        %s456 = scalar_select %p455, %s454, 4
        %s457 = smul.addr %s456, 8
        %s458 = scalar_lea.vmem %s3, %s457
        %s459 = smul.u32 %s20, 5
        %s460 = sadd.s32 %s459, %s21
        %p461 = scmp.lt.s32.totalorder %s460, 4
        %s462 = scalar_select %p461, %s460, 4
        %p463 = scmp.eq.s32.totalorder %s21, 0
        // Predicated region
        $region151: #{tpu_custom_call.1} parent=137 // pred_check
          %p464 = pneg %p463
        $region152: #{tpu_custom_call.1} parent=137 // pred_check_branch
          %466 = sbr.rel (%p464) target = $region154
        $region153: #{tpu_custom_call.1} parent=137 // pred_region
          %467 = vst [vmem:[#allocation5] sm:$0xff] 0.0
        $region154: #{tpu_custom_call.1} parent=137 // pred_fallthru
          _
        %s468 = smul.u32 %s20, 5
        %s469 = sadd.s32 %s468, %s21
        %s470 = smul.u32 %s469, 1024
        %v471 = vlaneseq
        %v472 = vshrl.u32 %v471, 7
        %v473 = vlaneseq
        %v474 = vand.u32 %v473, 127
        %v475 = vmul.u32 %v472, 128
        %v476 = vstv %s470
        %v477 = vadd.s32 %v476, %v475
        %v478 = vadd.s32 %v477, %v474
        %vm479 = vcmp.lt.s32.totalorder %v478, 4200
        %v480 = vld [vmem:[%s458] sm:$0xff]
        %vm481 = vcmp.gt.s32.totalorder %v480, 0
        %vm482 = vmand %vm479, %vm481
        %vm483 = vcmp.eq.s32.totalorder %v480, 0
        %vm484 = vmand %vm479, %vm483
        %v485 = vld [vmem:[%s391] sm:$0xff]
        %v486 = vld [vmem:[%s398] sm:$0xff]
        %v487 = vsub.f32 %v485, %v486
        %v488 = vand.u32 2147483647, %v487
        %vm489 = vcmp.lt.f32.partialorder %v488, 1.0
        %v490 = vmul.f32 %v487, 0.5
        %v491 = vmul.f32 %v490, %v487
        %v492 = vsub.f32 %v488, 0.5
        %v493 = vsel %vm489, %v491, %v492
        %v494 = vadd.f32 %v493, 0.0
        %s495 = scalar_lea.vmem %s391, 8 [#allocation2]
        %v496 = vld [vmem:[%s495] sm:$0xff]
        %s497 = scalar_lea.vmem %s398, 8 [#allocation3]
        %v498 = vld [vmem:[%s497] sm:$0xff]
        %v499 = vsub.f32 %v496, %v498
        %v500 = vand.u32 2147483647, %v499
        %vm501 = vcmp.lt.f32.partialorder %v500, 1.0
        %v502 = vmul.f32 %v499, 0.5
        %v503 = vmul.f32 %v502, %v499
        %v504 = vsub.f32 %v500, 0.5
        %v505 = vsel %vm501, %v503, %v504
        %v506 = vadd.f32 %v494, %v505
        %v507 = vsel %vm482, %v506, 0.0
        %v508 = vld [vmem:[%s405] sm:$0xff]
        %s509 = scalar_lea.vmem %s405, 8 [#allocation4]
        %v510 = vld [vmem:[%s509] sm:$0xff]
        %s511 = scalar_lea.vmem %s405, 16 [#allocation4]
        %v512 = vld [vmem:[%s511] sm:$0xff]
        %s513 = scalar_lea.vmem %s405, 24 [#allocation4]
        %v514 = vld [vmem:[%s513] sm:$0xff]
        %s515 = scalar_lea.vmem %s405, 32 [#allocation4]
        %v516 = vld [vmem:[%s515] sm:$0xff]
        %v517 = vmax.f32 %v508, %v510
        %v518 = vmax.f32 %v517, %v512
        %v519 = vmax.f32 %v518, %v514
        %v520 = vmax.f32 %v519, %v516
        %v521 = vsub.f32 %v508, %v520
        %v522 = vmul.f32 %v521, 1.442695
        %v523 = vpow.pop %v522
        %v524 = vadd.f32 %v523, 0.0
        %v525 = vsel %vm483, %v508, 0.0
        %v526 = vadd.f32 %v525, 0.0
        %v527 = vsub.f32 %v510, %v520
        %v528 = vmul.f32 %v527, 1.442695
        %v529 = vpow.pop %v528
        %v530 = vadd.f32 %v524, %v529
        %vm531 = vcmp.eq.s32.totalorder %v480, 1
        %v532 = vsel %vm531, %v510, 0.0
        %v533 = vadd.f32 %v526, %v532
        %v534 = vsub.f32 %v512, %v520
        %v535 = vmul.f32 %v534, 1.442695
        %v536 = vpow.pop %v535
        %v537 = vadd.f32 %v530, %v536
        %vm538 = vcmp.eq.s32.totalorder %v480, 2
        %v539 = vsel %vm538, %v512, 0.0
        %v540 = vadd.f32 %v533, %v539
        %v541 = vsub.f32 %v514, %v520
        %v542 = vmul.f32 %v541, 1.442695
        %v543 = vpow.pop %v542
        %v544 = vadd.f32 %v537, %v543
        %vm545 = vcmp.eq.s32.totalorder %v480, 3
        %v546 = vsel %vm545, %v514, 0.0
        %v547 = vadd.f32 %v540, %v546
        %v548 = vsub.f32 %v516, %v520
        %v549 = vmul.f32 %v548, 1.442695
        %v550 = vpow.pop %v549
        %v551 = vadd.f32 %v544, %v550
        %vm552 = vcmp.eq.s32.totalorder %v480, 4
        %v553 = vsel %vm552, %v516, 0.0
        %v554 = vadd.f32 %v547, %v553
        %v555 = vlog2.pop %v551
        %v556 = vmul.f32 %v555, 0.6931472
        %v557 = vadd.f32 %v556, %v520
        %v558 = vsub.f32 %v557, %v554
        %v559 = vld [vmem:[#allocation5] sm:$0x1]
        %v560 = vsel %vm482, 1, 0
        %v561 = vcvt.s32.f32 %v560
        %v562 = vrot.slane %v561, 4
        %v563 = vadd.f32 %v561, %v562
        %v564 = vrot.slane %v563, 2
        %v565 = vadd.f32 %v563, %v564
        %v566 = vrot.slane %v565, 1
        %v567 = vadd.f32 %v565, %v566
        %v568 = vadd.f32 %v559, %v567
        %569 = vst [vmem:[#allocation5] sm:$0x1] %v568
        %v570 = vld [vmem:[#allocation5 + $0x1] sm:$0x1]
        %v571 = vsel %vm484, 1, 0
        %v572 = vcvt.s32.f32 %v571
        %v573 = vrot.slane %v572, 4
        %v574 = vadd.f32 %v572, %v573
        %v575 = vrot.slane %v574, 2
        %v576 = vadd.f32 %v574, %v575
        %v577 = vrot.slane %v576, 1
        %v578 = vadd.f32 %v576, %v577
        %v579 = vadd.f32 %v570, %v578
        %580 = vst [vmem:[#allocation5 + $0x1] sm:$0x1] %v579
        %v581 = vld [vmem:[#allocation5 + $0x2] sm:$0x1]
        %v582 = vrot.slane %v507, 4
        %v583 = vadd.f32 %v507, %v582
        %v584 = vrot.slane %v583, 2
        %v585 = vadd.f32 %v583, %v584
        %v586 = vrot.slane %v585, 1
        %v587 = vadd.f32 %v585, %v586
        %v588 = vadd.f32 %v581, %v587
        %589 = vst [vmem:[#allocation5 + $0x2] sm:$0x1] %v588
        %v590 = vld [vmem:[#allocation5 + $0x3] sm:$0x1]
        %v591 = vsel %vm482, %v558, 0.0
        %v592 = vrot.slane %v591, 4
        %v593 = vadd.f32 %v591, %v592
        %v594 = vrot.slane %v593, 2
        %v595 = vadd.f32 %v593, %v594
        %v596 = vrot.slane %v595, 1
        %v597 = vadd.f32 %v595, %v596
        %v598 = vadd.f32 %v590, %v597
        %599 = vst [vmem:[#allocation5 + $0x3] sm:$0x1] %v598
        %v600 = vld [vmem:[#allocation5 + $0x4] sm:$0x1]
        %v601 = vsel %vm484, %v558, 0.0
        %v602 = vrot.slane %v601, 4
        %v603 = vadd.f32 %v601, %v602
        %v604 = vrot.slane %v603, 2
        %v605 = vadd.f32 %v603, %v604
        %v606 = vrot.slane %v605, 1
        %v607 = vadd.f32 %v605, %v606
        %v608 = vadd.f32 %v600, %v607
        %609 = vst [vmem:[#allocation5 + $0x4] sm:$0x1] %v608
        // Predicated region
        $region155: #{tpu_custom_call.1} parent=137 // pred_check
          %p610 = pneg %p182
        $region156: #{tpu_custom_call.1} parent=137 // pred_check_branch
          %612 = sbr.rel (%p610) target = $region158
        $region157: #{tpu_custom_call.1} parent=137 // pred_region
          %s614 = ssub.s32 128, 128
          %615 = vsyncadd [#allocation6], %s614
          %s616 = smul.addr %s20, 128
          %s617 = scalar_lea.hbm %s4, %s616
          %s619 = sshll.u32 [#allocation5], 4
          %s620 = int_to_ptr.vmem [resolvable:$true] %s619
          %622 = dma.vmem_to_hbm [thread:$0]  %s620, 128, %s617, [#allocation6]
        $region158: #{tpu_custom_call.1} parent=137 // pred_fallthru
          _
        // Predicated region
        $region159: #{tpu_custom_call.1} parent=137 // pred_check
          %p623 = pneg %p182
        $region160: #{tpu_custom_call.1} parent=137 // pred_check_branch
          %625 = sbr.rel (%p623) target = $region162
        $region161: #{tpu_custom_call.1} parent=137 // pred_region
          %626 = dma.done [#allocation6], 128
        $region162: #{tpu_custom_call.1} parent=137 // pred_fallthru
          _
      $region138: #{tpu_custom_call.1} parent=5 // pred_fallthru
        _
      %p627 = scmp.le.s32.totalorder 2, %s11
      // Predicated region
      $region163: #{tpu_custom_call.1} parent=5 // pred_check
        %p628 = pneg %p627
      $region164: #{tpu_custom_call.1} parent=5 // pred_check_branch
        %630 = sbr.rel (%p628) target = $region166
      $region165: #{tpu_custom_call.1} parent=5 // pred_region
        %s631 = ssub.s32 %s11, 2
      $region166: #{tpu_custom_call.1} parent=5 // pred_fallthru
        _
    $region6: #{tpu_custom_call.1} parent=1 // loop_footer
      %s15 = sadd.s32 1, %s11
    $region7: #{tpu_custom_call.1} parent=1 // loop_footer_branch
      %10 = sbr.rel target = $region3
    $region8: #{tpu_custom_call.1} parent=1 // loop_exit
      _
    %632 = vsyncpa [#allocation6], 1
    %s633 = scalar_lea.sflag [#allocation6], 1
    %634 = vsyncpa %s633, 1

</llo_original>
